<compile_context>
chip_gen: v5e
topology: v5e:2x2
jax: 0.10.0
libtpu: 0.0.40
codegen_flags: <defaults>
</compile_context>

<pallas_src>
import jax
import jax.numpy as jnp
from jax.experimental import pallas as pl
from jax.experimental.pallas import tpu as pltpu


LANE_WIDTH = 512       # last-dim tile: large multiple of 128 -> unmasked vst
MAX_ROW_TILE = 1024    # 1024 rows x 512 lanes x 2 feats x 4 B = 4 MiB input/step


def _round_up(v, m):
    return ((v + m - 1) // m) * m


def _sigmoid_eup(z):
    # sigmoid(z) == 0.5 * tanh(0.5 * z) + 0.5  -> single EUP push per call.
    return 0.5 * jnp.tanh(0.5 * z) + 0.5


def xor_mlp_kernel(p_ref, x_ref, o_ref):
    # p_ref (SMEM, f32[9]): [w1_00, w1_01, w1_10, w1_11, b1_0, b1_1,
    #                        w2_0,  w2_1,  b2]   (w[out, in] layout).
    # x_ref (VMEM, f32[2, TM, LW]): feature-major, batch across sublanes+lanes.
    # o_ref (VMEM, f32[TM, LW])
    x0 = x_ref[0]                       # (TM, LW)
    x1 = x_ref[1]                       # (TM, LW)

    w1_00 = p_ref[0]
    w1_01 = p_ref[1]
    w1_10 = p_ref[2]
    w1_11 = p_ref[3]
    b1_0 = p_ref[4]
    b1_1 = p_ref[5]
    w2_0 = p_ref[6]
    w2_1 = p_ref[7]
    b2_0 = p_ref[8]

    # fc1 + sigmoid: explicit VPU FMAs (K=2 matmul would waste >98% of the MXU).
    h0 = _sigmoid_eup(w1_00 * x0 + w1_01 * x1 + b1_0)
    h1 = _sigmoid_eup(w1_10 * x0 + w1_11 * x1 + b1_1)

    # fc2 + sigmoid.
    o_ref[...] = _sigmoid_eup(w2_0 * h0 + w2_1 * h1 + b2_0)


def xor_model_forward(x, w1, b1, w2, b2):
    """x: (N, 2) float32. Weights in PyTorch layout:
       w1 (2, 2) = (out, in), b1 (2,), w2 (1, 2), b2 (1,).
       Returns (N, 1) float32."""
    n = x.shape[0]

    # Pack all 9 parameters into a single SMEM scalar table.
    params = jnp.concatenate(
        [w1.reshape(-1), b1.reshape(-1), w2.reshape(-1), b2.reshape(-1)]
    ).astype(jnp.float32)                                   # (9,)

    lw = LANE_WIDTH
    m = pl.cdiv(n, lw)                                      # rows of the slab
    n_pad = m * lw

    # Feature-major dense slab: (N,2) -> (2,N) -> pad only to a lane-width
    # multiple -> free reshape to (2, M, LW).  Batch occupies sublanes AND
    # lanes inside the kernel.
    xt = x.astype(jnp.float32).T                            # (2, N)
    if n_pad != n:
        xt = jnp.pad(xt, ((0, 0), (0, n_pad - n)))
    xt = xt.reshape(2, m, lw)                               # (2, M, LW)

    # Row tile: multi-MiB blocks, but keep >= ~4 grid blocks for large batches
    # so both TensorCores get work on v7x.  No padding of M: the ragged last
    # row-block is masked by Pallas.
    if m <= 8:
        tm = m                                              # == full dim, OK
    else:
        tm = min(MAX_ROW_TILE, _round_up(pl.cdiv(m, 4), 8))
    grid = (pl.cdiv(m, tm),)

    out = pl.pallas_call(
        xor_mlp_kernel,
        out_shape=jax.ShapeDtypeStruct((m, lw), jnp.float32),
        grid=grid,
        in_specs=[
            # Tiny parameter table -> SMEM scalars (no padded VMEM tile DMAs).
            pl.BlockSpec(memory_space=pltpu.MemorySpace.SMEM),
            # Dense input block: (2, tm, lw), double-buffered by Pallas.
            pl.BlockSpec((2, tm, lw), lambda i: (0, i, 0)),
        ],
        out_specs=pl.BlockSpec((tm, lw), lambda i: (i, 0)),
        compiler_params=pltpu.CompilerParams(
            dimension_semantics=("parallel",),   # megacore sharding on v7x
            vmem_limit_bytes=32 * 1024 * 1024,
        ),
        cost_estimate=pl.CostEstimate(
            flops=18 * n_pad,
            transcendentals=3 * n_pad,
            bytes_accessed=(2 * n_pad + n_pad) * 4 + 9 * 4,
        ),
    )(params, xt)

    # Back to the PyTorch-facing (N, 1) contract (reshape is free; slice drops
    # the lane-pad tail).
    return out.reshape(-1)[:n].reshape(n, 1)


def init_params(key):
    """PyTorch-shaped params: fc1 weight (2,2)/bias (2,), fc2 weight (1,2)/bias (1,).
       Default nn.Linear init: U(-1/sqrt(fan_in), 1/sqrt(fan_in)), fan_in = 2."""
    k1, k2, k3, k4 = jax.random.split(key, 4)
    bound = 1.0 / jnp.sqrt(2.0)
    w1 = jax.random.uniform(k1, (2, 2), jnp.float32, -bound, bound)  # (out, in)
    b1 = jax.random.uniform(k2, (2,), jnp.float32, -bound, bound)
    w2 = jax.random.uniform(k3, (1, 2), jnp.float32, -bound, bound)  # (out, in)
    b2 = jax.random.uniform(k4, (1,), jnp.float32, -bound, bound)
    return w1, b1, w2, b2


def reference_forward(x, w1, b1, w2, b2):
    h = jax.nn.sigmoid(x @ w1.T + b1)
    return jax.nn.sigmoid(h @ w2.T + b2)


if __name__ == "__main__":
    key = jax.random.PRNGKey(0)
    kx, kp = jax.random.split(key)

    w1, b1, w2, b2 = init_params(kp)

    # Small batch of 2-feature inputs (XOR-style), batch = 8.
    x = jax.random.uniform(kx, (8, 2), jnp.float32)
    out = jax.block_until_ready(xor_model_forward(x, w1, b1, w2, b2))
    ref = reference_forward(x, w1, b1, w2, b2)
    assert out.shape == (8, 1)
    assert jnp.allclose(out, ref, atol=1e-4, rtol=1e-4)

    # Ragged batch (not a multiple of the lane width), single grid block.
    x_med = jax.random.uniform(jax.random.PRNGKey(1), (1000, 2), jnp.float32)
    out_med = jax.block_until_ready(xor_model_forward(x_med, w1, b1, w2, b2))
    ref_med = reference_forward(x_med, w1, b1, w2, b2)
    assert out_med.shape == (1000, 1)
    assert jnp.allclose(out_med, ref_med, atol=1e-4, rtol=1e-4)

    # Larger ragged batch exercising a multi-block grid with a ragged last
    # row-block (no pad-to-tile in the wrapper).
    x_big = jax.random.uniform(jax.random.PRNGKey(2), (70001, 2), jnp.float32)
    out_big = jax.block_until_ready(xor_model_forward(x_big, w1, b1, w2, b2))
    ref_big = reference_forward(x_big, w1, b1, w2, b2)
    assert out_big.shape == (70001, 1)
    assert jnp.allclose(out_big, ref_big, atol=1e-4, rtol=1e-4)

    print("KERNEL_OK")
</pallas_src>

<mosaic_0001>
module attributes {stable_mosaic.version = 11 : i64} {
  func.func @xor_mlp_kernel(%arg0: i32, %arg1: memref<9xf32, #tpu.memory_space<smem>>, %arg2: memref<2x1x512xf32, #tpu.memory_space<vmem>>, %arg3: memref<1x512xf32, #tpu.memory_space<vmem>>) attributes {dimension_semantics = [#tpu.dimension_semantics<parallel>], iteration_bounds = array<i64: 1>, scalar_prefetch = 0 : i64, scratch_operands = 0 : i64, tpu.core_type = #tpu.core_type<tc>, window_params = [{transform_indices = @transform_0, window_bounds = array<i64: 9>}, {transform_indices = @transform_1, window_bounds = array<i64: 2, 1, 512>}, {transform_indices = @transform_2, window_bounds = array<i64: 1, 512>}]} {
    %c0 = arith.constant 0 : index
    %c0_0 = arith.constant 0 : index
    %c0_1 = arith.constant 0 : index
    %0 = vector.load %arg2[%c0, %c0_0, %c0_1] : memref<2x1x512xf32, #tpu.memory_space<vmem>>, vector<1x1x512xf32>
    %1 = vector.shape_cast %0 : vector<1x1x512xf32> to vector<1x512xf32>
    %c1 = arith.constant 1 : index
    %c0_2 = arith.constant 0 : index
    %c0_3 = arith.constant 0 : index
    %2 = vector.load %arg2[%c1, %c0_2, %c0_3] : memref<2x1x512xf32, #tpu.memory_space<vmem>>, vector<1x1x512xf32>
    %3 = vector.shape_cast %2 : vector<1x1x512xf32> to vector<1x512xf32>
    %c0_4 = arith.constant 0 : index
    %4 = memref.load %arg1[%c0_4] : memref<9xf32, #tpu.memory_space<smem>>
    %c1_5 = arith.constant 1 : index
    %5 = memref.load %arg1[%c1_5] : memref<9xf32, #tpu.memory_space<smem>>
    %c2 = arith.constant 2 : index
    %6 = memref.load %arg1[%c2] : memref<9xf32, #tpu.memory_space<smem>>
    %c3 = arith.constant 3 : index
    %7 = memref.load %arg1[%c3] : memref<9xf32, #tpu.memory_space<smem>>
    %c4 = arith.constant 4 : index
    %8 = memref.load %arg1[%c4] : memref<9xf32, #tpu.memory_space<smem>>
    %c5 = arith.constant 5 : index
    %9 = memref.load %arg1[%c5] : memref<9xf32, #tpu.memory_space<smem>>
    %c6 = arith.constant 6 : index
    %10 = memref.load %arg1[%c6] : memref<9xf32, #tpu.memory_space<smem>>
    %c7 = arith.constant 7 : index
    %11 = memref.load %arg1[%c7] : memref<9xf32, #tpu.memory_space<smem>>
    %c8 = arith.constant 8 : index
    %12 = memref.load %arg1[%c8] : memref<9xf32, #tpu.memory_space<smem>>
    %13 = vector.broadcast %4 : f32 to vector<1x512xf32>
    %14 = arith.mulf %13, %1 : vector<1x512xf32>
    %15 = vector.broadcast %5 : f32 to vector<1x512xf32>
    %16 = arith.mulf %15, %3 : vector<1x512xf32>
    %17 = arith.addf %14, %16 : vector<1x512xf32>
    %18 = vector.broadcast %8 : f32 to vector<1x512xf32>
    %19 = arith.addf %17, %18 : vector<1x512xf32>
    %cst = arith.constant 5.000000e-01 : f32
    %20 = vector.broadcast %cst : f32 to vector<1x512xf32>
    %21 = arith.mulf %20, %19 : vector<1x512xf32>
    %22 = math.tanh %21 : vector<1x512xf32>
    %cst_6 = arith.constant 5.000000e-01 : f32
    %23 = vector.broadcast %cst_6 : f32 to vector<1x512xf32>
    %24 = arith.mulf %23, %22 : vector<1x512xf32>
    %cst_7 = arith.constant 5.000000e-01 : f32
    %25 = vector.broadcast %cst_7 : f32 to vector<1x512xf32>
    %26 = arith.addf %24, %25 : vector<1x512xf32>
    %27 = vector.broadcast %6 : f32 to vector<1x512xf32>
    %28 = arith.mulf %27, %1 : vector<1x512xf32>
    %29 = vector.broadcast %7 : f32 to vector<1x512xf32>
    %30 = arith.mulf %29, %3 : vector<1x512xf32>
    %31 = arith.addf %28, %30 : vector<1x512xf32>
    %32 = vector.broadcast %9 : f32 to vector<1x512xf32>
    %33 = arith.addf %31, %32 : vector<1x512xf32>
    %cst_8 = arith.constant 5.000000e-01 : f32
    %34 = vector.broadcast %cst_8 : f32 to vector<1x512xf32>
    %35 = arith.mulf %34, %33 : vector<1x512xf32>
    %36 = math.tanh %35 : vector<1x512xf32>
    %cst_9 = arith.constant 5.000000e-01 : f32
    %37 = vector.broadcast %cst_9 : f32 to vector<1x512xf32>
    %38 = arith.mulf %37, %36 : vector<1x512xf32>
    %cst_10 = arith.constant 5.000000e-01 : f32
    %39 = vector.broadcast %cst_10 : f32 to vector<1x512xf32>
    %40 = arith.addf %38, %39 : vector<1x512xf32>
    %41 = vector.broadcast %10 : f32 to vector<1x512xf32>
    %42 = arith.mulf %41, %26 : vector<1x512xf32>
    %43 = vector.broadcast %11 : f32 to vector<1x512xf32>
    %44 = arith.mulf %43, %40 : vector<1x512xf32>
    %45 = arith.addf %42, %44 : vector<1x512xf32>
    %46 = vector.broadcast %12 : f32 to vector<1x512xf32>
    %47 = arith.addf %45, %46 : vector<1x512xf32>
    %cst_11 = arith.constant 5.000000e-01 : f32
    %48 = vector.broadcast %cst_11 : f32 to vector<1x512xf32>
    %49 = arith.mulf %48, %47 : vector<1x512xf32>
    %50 = math.tanh %49 : vector<1x512xf32>
    %cst_12 = arith.constant 5.000000e-01 : f32
    %51 = vector.broadcast %cst_12 : f32 to vector<1x512xf32>
    %52 = arith.mulf %51, %50 : vector<1x512xf32>
    %cst_13 = arith.constant 5.000000e-01 : f32
    %53 = vector.broadcast %cst_13 : f32 to vector<1x512xf32>
    %54 = arith.addf %52, %53 : vector<1x512xf32>
    %c0_14 = arith.constant 0 : index
    %c0_15 = arith.constant 0 : index
    %55 = vector.load %arg3[%c0_14, %c0_15] : memref<1x512xf32, #tpu.memory_space<vmem>>, vector<1x512xf32>
    tpu.vector_store %arg3[%c0_14, %c0_15], %54 {strides = array<i32>} : memref<1x512xf32, #tpu.memory_space<vmem>>, vector<1x512xf32>,
    return
  }
  func.func @transform_0(%arg0: i32) -> i32 {
    %c0_i32 = arith.constant 0 : i32
    %c0_i32_0 = arith.constant 0 : i32
    return %c0_i32 : i32
  }
  func.func @transform_1(%arg0: i32) -> (i32, i32, i32) {
    %c0_i32 = arith.constant 0 : i32
    %c0_i32_0 = arith.constant 0 : i32
    %c0_i32_1 = arith.constant 0 : i32
    return %c0_i32, %arg0, %c0_i32_0 : i32, i32, i32
  }
  func.func @transform_2(%arg0: i32) -> (i32, i32) {
    %c0_i32 = arith.constant 0 : i32
    %c0_i32_0 = arith.constant 0 : i32
    return %arg0, %c0_i32 : i32, i32
  }
}

</mosaic_0001>

<llo_original>
// kernel: tpu_custom_call.1
$region0: #{tpu_custom_call.1}
  #allocation0 [shape = 'u32[]', space=smem, size = 0x4, offset = 0x4, fixed_abs, tag = 'smem constant byte address 0x4 - core index']
  #allocation1 [shape = 'u32[72,128]{1,0:T(1,128)}', space=vmem, size = 0x9000, scoped, tag = 'internal scratch']
  %s0 = inlined_call_operand.hbm [shape: f32[9], index: 0, kind: input, shape index: {}]
  %s1 = inlined_call_operand.hbm [shape: f32[2,1,512], index: 1, kind: input, shape index: {}]
  %s2 = inlined_call_operand.hbm [shape: f32[1,512], index: 2, kind: output, shape index: {}]
  %s3 = sld [smem:[#allocation0]]
  $region26: #{tpu_custom_call.1} parent=0
    _
  %s5 = ssub.s32 1, %s3
  %s6 = scalar_select 0, %s5, %s3
  $region1: #{tpu_custom_call.1} parent=0
    #allocation2 [shape = 'u8[512]{0}', space=smem, size = 0x200, scoped, tag = 'input window, operand 0, single buffered']
    #allocation3 [shape = 's32[1]{0}', space=sflag, size = 0x4, scoped, tag = 'scoped memory for tpu_custom_call.1']
    #allocation4 [shape = 's32[1]{0}', space=sflag, size = 0x4, scoped, tag = 'scoped memory for tpu_custom_call.1']
    #allocation5 [shape = 's32[1]{0}', space=sflag, size = 0x4, scoped, tag = 'scoped memory for tpu_custom_call.1']
    #allocation6 [shape = 'u8[4096]{0}', space=vmem, size = 0x1000, scoped, tag = 'input window, operand 1, single buffered']
    #allocation7 [shape = 'u8[2048]{0}', space=vmem, size = 0x800, scoped, tag = 'output window, operand 0, single buffered']
    %7 = vsyncpa [#allocation5], 0
    %8 = vsyncpa [#allocation3], 0
    %9 = vsyncpa [#allocation4], 0
    // Predicated region
    $region2: #{tpu_custom_call.1} parent=1 // pred_check
      _
    $region3: #{tpu_custom_call.1} parent=1 // pred_check_branch
      %11 = sbr.rel (0) target = $region5
    $region4: #{tpu_custom_call.1} parent=1 // pred_region
      %13 = vsyncadd [#allocation5], 0
      %s15 = sshll.u32 %s0, 4
      %s16 = int_to_ptr.hbm [resolvable:$true] %s15
      %18 = dma.hbm_to_smem %s16, 16, [#allocation2], [#allocation5]
    $region5: #{tpu_custom_call.1} parent=1 // pred_fallthru
      _
    // Predicated region
    $region6: #{tpu_custom_call.1} parent=1 // pred_check
      _
    $region7: #{tpu_custom_call.1} parent=1 // pred_check_branch
      %20 = sbr.rel (0) target = $region9
    $region8: #{tpu_custom_call.1} parent=1 // pred_region
      %22 = vsyncadd [#allocation3], 0
      %s23 = sshll.u32 %s1, 4
      %s24 = int_to_ptr.hbm [resolvable:$true] %s23
      %s25 = sshll.u32 [#allocation6], 4
      %s26 = int_to_ptr.vmem [resolvable:$true] %s25
      %31 = dma.hbm_to_vmem [thread:$0]  %s24, 128, %s26, [#allocation3], 64, 64, 4
    $region9: #{tpu_custom_call.1} parent=1 // pred_fallthru
      _
    // Predicated region
    $region10: #{tpu_custom_call.1} parent=1 // pred_check
      _
    $region11: #{tpu_custom_call.1} parent=1 // pred_check_branch
      %33 = sbr.rel (0) target = $region13
    $region12: #{tpu_custom_call.1} parent=1 // pred_region
      %35 = dma.done [#allocation5], 16
    $region13: #{tpu_custom_call.1} parent=1 // pred_fallthru
      _
    // Predicated region
    $region14: #{tpu_custom_call.1} parent=1 // pred_check
      _
    $region15: #{tpu_custom_call.1} parent=1 // pred_check_branch
      %37 = sbr.rel (0) target = $region17
    $region16: #{tpu_custom_call.1} parent=1 // pred_region
      %39 = dma.done [#allocation3], 128
    $region17: #{tpu_custom_call.1} parent=1 // pred_fallthru
      _
    %40 = sfence
    %v41 = vld [vmem:[#allocation6] sm:$0xf]
    %s42 = scalar_lea.vmem [#allocation6], 4
    %v43 = vld [vmem:[%s42] sm:$0xf]
    %s44 = sld [smem:[#allocation2]]
    %s45 = sld [smem:[#allocation2 + $0x1]]
    %s46 = sld [smem:[#allocation2 + $0x2]]
    %s47 = sld [smem:[#allocation2 + $0x3]]
    %s48 = sld [smem:[#allocation2 + $0x4]]
    %s49 = sld [smem:[#allocation2 + $0x5]]
    %s50 = sld [smem:[#allocation2 + $0x6]]
    %s51 = sld [smem:[#allocation2 + $0x7]]
    %s52 = sld [smem:[#allocation2 + $0x8]]
    %v53 = vstv %s44
    %v54 = vmul.f32 %v53, %v41
    %v55 = vstv %s45
    %v56 = vmul.f32 %v55, %v43
    %v57 = vadd.f32 %v54, %v56
    %v58 = vstv %s48
    %v59 = vadd.f32 %v57, %v58
    %v60 = vmul.f32 %v59, 0.5
    %v61 = vtanh.pop %v60
    %v62 = vmul.f32 %v61, 0.5
    %v63 = vadd.f32 %v62, 0.5
    %v64 = vstv %s46
    %v65 = vmul.f32 %v64, %v41
    %v66 = vstv %s47
    %v67 = vmul.f32 %v66, %v43
    %v68 = vadd.f32 %v65, %v67
    %v69 = vstv %s49
    %v70 = vadd.f32 %v68, %v69
    %v71 = vmul.f32 %v70, 0.5
    %v72 = vtanh.pop %v71
    %v73 = vmul.f32 %v72, 0.5
    %v74 = vadd.f32 %v73, 0.5
    %v75 = vstv %s50
    %v76 = vmul.f32 %v75, %v63
    %v77 = vstv %s51
    %v78 = vmul.f32 %v77, %v74
    %v79 = vadd.f32 %v76, %v78
    %v80 = vstv %s52
    %v81 = vadd.f32 %v79, %v80
    %v82 = vmul.f32 %v81, 0.5
    %v83 = vtanh.pop %v82
    %v84 = vmul.f32 %v83, 0.5
    %v85 = vadd.f32 %v84, 0.5
    %v86 = vlaneseq
    %vm87 = vcmp.ge.s32.totalorder %v86, 0
    %vm88 = vcmp.lt.s32.totalorder %v86, 512
    %vm89 = vmand %vm87, %vm88
    %90 = vst.msk [vmem:[#allocation7] sm:$0xf] %vm89, %v85
    // Predicated region
    $region18: #{tpu_custom_call.1} parent=1 // pred_check
      _
    $region19: #{tpu_custom_call.1} parent=1 // pred_check_branch
      %92 = sbr.rel (0) target = $region21
    $region20: #{tpu_custom_call.1} parent=1 // pred_region
      %94 = vsyncadd [#allocation4], 0
      %s96 = sshll.u32 [#allocation7], 4
      %s97 = int_to_ptr.vmem [resolvable:$true] %s96
      %s98 = sshll.u32 %s2, 4
      %s99 = int_to_ptr.hbm [resolvable:$true] %s98
      %101 = dma.vmem_to_hbm [thread:$0]  %s97, 64, %s99, [#allocation4]
    $region21: #{tpu_custom_call.1} parent=1 // pred_fallthru
      _
    // Predicated region
    $region22: #{tpu_custom_call.1} parent=1 // pred_check
      _
    $region23: #{tpu_custom_call.1} parent=1 // pred_check_branch
      %103 = sbr.rel (0) target = $region25
    $region24: #{tpu_custom_call.1} parent=1 // pred_region
      %105 = dma.done [#allocation4], 64
    $region25: #{tpu_custom_call.1} parent=1 // pred_fallthru
      _
    %106 = vsyncpa [#allocation3], 1
    %107 = vsyncpa [#allocation4], 1
    %108 = vsyncpa [#allocation5], 1

</llo_original>
